<compile_context>
chip_gen: v7x
topology: tpu7x:2x2x1
jax: 0.10.0
libtpu: 0.0.40
codegen_flags: <defaults>
</compile_context>

<pallas_src>
import functools

import jax
import jax.numpy as jnp
from jax.experimental import pallas as pl
from jax.experimental.pallas import tpu as pltpu

_LANE = 128


def _rbf_kernel(x_ref, onehot_ref, g_ref, o_ref, *, inv_denom):
    # x_ref:      (tb, 128)      tile of flattened inputs
    # onehot_ref: (128, 128*G)   bf16 one-hot lane-replication matrix (loaded once)
    # g_ref:      (1, 128*G)     grid centers pre-scaled by 1/denominator (loaded once)
    # o_ref:      (tb, 128*G)    output tile already in final row-major (..., G) order
    x = x_ref[...].astype(jnp.float32) * inv_denom        # scale in the small (tb,128) domain
    onehot = onehot_ref[...]

    # Exact lane replication via MXU: split x into 3 bf16 parts (bf16x3) so the
    # one-hot selection is exact regardless of MXU matmul precision.
    resid = x
    x_rep = None
    for _ in range(3):
        part = resid.astype(jnp.bfloat16)
        resid = resid - part.astype(jnp.float32)
        contrib = jnp.dot(part, onehot, preferred_element_type=jnp.float32)
        x_rep = contrib if x_rep is None else x_rep + contrib

    d = x_rep - g_ref[...]                                  # (tb, 128*G)
    o_ref[...] = jnp.exp(-(d * d)).astype(o_ref.dtype)


def _pick_block_rows(rows: int, target: int) -> int:
    """Row tile per grid step: multiple of 16, <= target, minimizing padding."""
    target = max(16, (target // 16) * 16)
    if rows <= target:
        return min(target, ((rows + 15) // 16) * 16)
    for tb in range(target, 63, -16):       # prefer an exact divisor (no padding)
        if rows % tb == 0:
            return tb
    return target                            # fall back: pad rows up to a multiple


def radial_basis_function(
    x: jax.Array,
    grid_min: float = -2.0,
    grid_max: float = 2.0,
    num_grids: int = 8,
    denominator: float | None = None,
    *,
    block_rows: int = 512,
) -> jax.Array:
    """exp(-((x[..., None] - grid)/denominator)^2) as a Pallas TPU kernel."""
    orig_shape = x.shape
    orig_dtype = x.dtype
    G = int(num_grids)
    denom = float(denominator) if denominator is not None else (grid_max - grid_min) / (G - 1)
    inv_denom = 1.0 / denom
    L = _LANE * G

    # Compute in f32; load/store the caller dtype when it is TPU-native so the
    # dominant output writeback is as narrow as possible.
    if orig_dtype == jnp.float32 or orig_dtype == jnp.bfloat16:
        io_dtype = orig_dtype
    else:
        io_dtype = jnp.float32

    n = x.size
    rows = -(-n // _LANE)
    tb = _pick_block_rows(rows, block_rows)
    steps = -(-rows // tb)
    rows_pad = steps * tb
    pad = rows_pad * _LANE - n

    x_flat = jnp.ravel(x).astype(io_dtype)
    if pad:
        x_flat = jnp.pad(x_flat, (0, pad))
    x2d = x_flat.reshape(rows_pad, _LANE)

    # Constant operands (their block index never changes -> DMA'd once).
    grid_vals = jnp.linspace(grid_min, grid_max, G, dtype=jnp.float32)
    g_row = (jnp.tile(grid_vals, _LANE) * inv_denom).reshape(1, L)
    src_lane = jnp.arange(L, dtype=jnp.int32) // G
    onehot = (src_lane[None, :] == jnp.arange(_LANE, dtype=jnp.int32)[:, None]).astype(jnp.bfloat16)

    kernel = functools.partial(_rbf_kernel, inv_denom=inv_denom)
    out_bytes = rows_pad * L * jnp.dtype(io_dtype).itemsize
    in_bytes = (x2d.size * jnp.dtype(io_dtype).itemsize + onehot.size * 2 + g_row.size * 4)

    out = pl.pallas_call(
        kernel,
        out_shape=jax.ShapeDtypeStruct((rows_pad, L), io_dtype),
        grid_spec=pltpu.PrefetchScalarGridSpec(
            num_scalar_prefetch=0,
            grid=(steps,),
            in_specs=[
                pl.BlockSpec((tb, _LANE), lambda i: (i, 0)),
                pl.BlockSpec((_LANE, L), lambda i: (0, 0)),
                pl.BlockSpec((1, L), lambda i: (0, 0)),
            ],
            out_specs=pl.BlockSpec((tb, L), lambda i: (i, 0)),
        ),
        compiler_params=pltpu.CompilerParams(
            dimension_semantics=("parallel",),
            vmem_limit_bytes=32 * 1024 * 1024,
        ),
        cost_estimate=pl.CostEstimate(
            flops=2 * 3 * rows_pad * _LANE * L + 5 * rows_pad * L,
            transcendentals=rows_pad * L,
            bytes_accessed=in_bytes + out_bytes,
        ),
    )(x2d, onehot, g_row)

    # Free reshape: (rows_pad, 128*G) row-major is already flat (rows_pad*128, G).
    out = out.reshape(rows_pad * _LANE, G)
    if pad:
        out = out[:n]            # only copies when padding was required
    out = out.reshape(orig_shape + (G,))
    if out.dtype != orig_dtype:
        out = out.astype(orig_dtype)
    return out


def _reference(x, grid_min=-2.0, grid_max=2.0, num_grids=8, denominator=None):
    denom = denominator if denominator is not None else (grid_max - grid_min) / (num_grids - 1)
    grid_vals = jnp.linspace(grid_min, grid_max, num_grids, dtype=jnp.float32)
    return jnp.exp(-(((x[..., None] - grid_vals) / denom) ** 2))


if __name__ == "__main__":
    key = jax.random.PRNGKey(0)

    # Small NCHW-style input consistent with using this module inside a conv KAN.
    x = jax.random.normal(key, (2, 4, 16, 16), dtype=jnp.float32) * 2.0
    out = jax.block_until_ready(radial_basis_function(x))
    ref = _reference(x)
    assert out.shape == (2, 4, 16, 16, 8), out.shape
    assert jnp.allclose(out, ref, atol=1e-5, rtol=1e-5), float(jnp.max(jnp.abs(out - ref)))

    # Multi-step grid path (2 grid steps), exact tiling.
    x2 = jax.random.normal(jax.random.PRNGKey(1), (4, 32, 32), dtype=jnp.float32) * 2.0
    out2 = jax.block_until_ready(radial_basis_function(x2, block_rows=16))
    assert out2.shape == (4, 32, 32, 8)
    assert jnp.allclose(out2, _reference(x2), atol=1e-5, rtol=1e-5)

    # Ragged size (not a multiple of 128) -> padding + unpad path.
    x3 = jax.random.normal(jax.random.PRNGKey(2), (3, 50, 7), dtype=jnp.float32) * 2.0
    out3 = jax.block_until_ready(radial_basis_function(x3))
    assert out3.shape == (3, 50, 7, 8)
    assert jnp.allclose(out3, _reference(x3), atol=1e-5, rtol=1e-5)

    print("KERNEL_OK")
</pallas_src>

<mosaic_0001>
module attributes {stable_mosaic.version = 11 : i64} {
  func.func @_rbf_kernel(%arg0: i32, %arg1: memref<16x128xf32, #tpu.memory_space<vmem>>, %arg2: memref<128x1024xbf16, #tpu.memory_space<vmem>>, %arg3: memref<1x1024xf32, #tpu.memory_space<vmem>>, %arg4: memref<16x1024xf32, #tpu.memory_space<vmem>>) attributes {dimension_semantics = [#tpu.dimension_semantics<parallel>], iteration_bounds = array<i64: 1>, scalar_prefetch = 0 : i64, scratch_operands = 0 : i64, tpu.core_type = #tpu.core_type<tc>, window_params = [{transform_indices = @transform_0, window_bounds = array<i64: 16, 128>}, {pipeline_mode = #tpu.pipeline_mode<synchronous>, transform_indices = @transform_1, window_bounds = array<i64: 128, 1024>}, {pipeline_mode = #tpu.pipeline_mode<synchronous>, transform_indices = @transform_2, window_bounds = array<i64: 1, 1024>}, {transform_indices = @transform_3, window_bounds = array<i64: 16, 1024>}]} {
    %c0 = arith.constant 0 : index
    %c0_0 = arith.constant 0 : index
    %0 = vector.load %arg1[%c0, %c0_0] : memref<16x128xf32, #tpu.memory_space<vmem>>, vector<16x128xf32>
    %cst = arith.constant 1.750000e+00 : f32
    %1 = vector.broadcast %cst : f32 to vector<16x128xf32>
    %2 = arith.mulf %0, %1 : vector<16x128xf32>
    %c0_1 = arith.constant 0 : index
    %c0_2 = arith.constant 0 : index
    %3 = vector.load %arg2[%c0_1, %c0_2] : memref<128x1024xbf16, #tpu.memory_space<vmem>>, vector<128x1024xbf16>
    %4 = arith.truncf %2 : vector<16x128xf32> to vector<16x128xbf16>
    %5 = arith.extf %4 : vector<16x128xbf16> to vector<16x128xf32>
    %6 = arith.subf %2, %5 : vector<16x128xf32>
    %cst_3 = arith.constant dense<0.000000e+00> : vector<16x1024xf32>
    %7 = tpu.matmul %4, %3, %cst_3 {dimension_numbers = #tpu.dot_dimension_numbers<[1], [0], [0], [1], [0, 0, 1, 1], [], []>} : vector<16x128xbf16>, vector<128x1024xbf16>, vector<16x1024xf32> -> vector<16x1024xf32>
    %8 = arith.truncf %6 : vector<16x128xf32> to vector<16x128xbf16>
    %9 = arith.extf %8 : vector<16x128xbf16> to vector<16x128xf32>
    %10 = arith.subf %6, %9 : vector<16x128xf32>
    %cst_4 = arith.constant dense<0.000000e+00> : vector<16x1024xf32>
    %11 = tpu.matmul %8, %3, %cst_4 {dimension_numbers = #tpu.dot_dimension_numbers<[1], [0], [0], [1], [0, 0, 1, 1], [], []>} : vector<16x128xbf16>, vector<128x1024xbf16>, vector<16x1024xf32> -> vector<16x1024xf32>
    %12 = arith.addf %7, %11 : vector<16x1024xf32>
    %13 = arith.truncf %10 : vector<16x128xf32> to vector<16x128xbf16>
    %cst_5 = arith.constant dense<0.000000e+00> : vector<16x1024xf32>
    %14 = tpu.matmul %13, %3, %cst_5 {dimension_numbers = #tpu.dot_dimension_numbers<[1], [0], [0], [1], [0, 0, 1, 1], [], []>} : vector<16x128xbf16>, vector<128x1024xbf16>, vector<16x1024xf32> -> vector<16x1024xf32>
    %15 = arith.addf %12, %14 : vector<16x1024xf32>
    %c0_6 = arith.constant 0 : index
    %c0_7 = arith.constant 0 : index
    %16 = vector.load %arg3[%c0_6, %c0_7] : memref<1x1024xf32, #tpu.memory_space<vmem>>, vector<1x1024xf32>
    %17 = vector.broadcast %16 : vector<1x1024xf32> to vector<16x1024xf32>
    %18 = arith.subf %15, %17 : vector<16x1024xf32>
    %19 = arith.mulf %18, %18 : vector<16x1024xf32>
    %cst_8 = arith.constant 0.000000e+00 : f32
    %20 = vector.broadcast %cst_8 : f32 to vector<16x1024xf32>
    %21 = arith.subf %20, %19 : vector<16x1024xf32>
    %22 = math.exp %21 : vector<16x1024xf32>
    %c0_9 = arith.constant 0 : index
    %c0_10 = arith.constant 0 : index
    %23 = vector.load %arg4[%c0_9, %c0_10] : memref<16x1024xf32, #tpu.memory_space<vmem>>, vector<16x1024xf32>
    tpu.vector_store %arg4[%c0_9, %c0_10], %22 {strides = array<i32>} : memref<16x1024xf32, #tpu.memory_space<vmem>>, vector<16x1024xf32>,
    return
  }
  func.func @transform_0(%arg0: i32) -> (i32, i32) {
    %c0_i32 = arith.constant 0 : i32
    %c0_i32_0 = arith.constant 0 : i32
    return %arg0, %c0_i32 : i32, i32
  }
  func.func @transform_1(%arg0: i32) -> (i32, i32) {
    %c0_i32 = arith.constant 0 : i32
    %c0_i32_0 = arith.constant 0 : i32
    %c0_i32_1 = arith.constant 0 : i32
    return %c0_i32, %c0_i32_0 : i32, i32
  }
  func.func @transform_2(%arg0: i32) -> (i32, i32) {
    %c0_i32 = arith.constant 0 : i32
    %c0_i32_0 = arith.constant 0 : i32
    %c0_i32_1 = arith.constant 0 : i32
    return %c0_i32, %c0_i32_0 : i32, i32
  }
  func.func @transform_3(%arg0: i32) -> (i32, i32) {
    %c0_i32 = arith.constant 0 : i32
    %c0_i32_0 = arith.constant 0 : i32
    return %arg0, %c0_i32 : i32, i32
  }
}

</mosaic_0001>

<llo_original>
// kernel: tpu_custom_call.1
$region0: #{tpu_custom_call.1}
  #allocation0 [shape = 'u32[]', space=smem, size = 0x4, offset = 0x4, fixed_abs, tag = 'smem constant byte address 0x4 - core index']
  #allocation1 [shape = 'u32[144,128]{1,0:T(1,128)}', space=vmem, size = 0x12000, scoped, tag = 'internal scratch']
  %s0 = inlined_call_operand.hbm [shape: f32[16,128], index: 0, kind: input, shape index: {}]
  %s1 = inlined_call_operand.hbm [shape: bf16[128,1024], index: 1, kind: input, shape index: {}]
  %s2 = inlined_call_operand.hbm [shape: f32[1,1024], index: 2, kind: input, shape index: {}]
  %s3 = inlined_call_operand.hbm [shape: f32[16,1024], index: 3, kind: output, shape index: {}]
  %s4 = sld [smem:[#allocation0]]
  $region34: #{tpu_custom_call.1} parent=0
    _
  %s6 = ssub.s32 1, %s4
  %s7 = scalar_select 0, %s6, %s4
  $region1: #{tpu_custom_call.1} parent=0
    #allocation2 [shape = 'u8[8192]{0}', space=vmem, size = 0x2000, scoped, tag = 'input window, operand 0, single buffered']
    #allocation3 [shape = 's32[1]{0}', space=sflag, size = 0x4, scoped, tag = 'scoped memory for tpu_custom_call.1']
    #allocation4 [shape = 's32[1]{0}', space=sflag, size = 0x4, scoped, tag = 'scoped memory for tpu_custom_call.1']
    #allocation5 [shape = 'u8[262144]{0}', space=vmem, size = 0x40000, scoped, tag = 'input window, operand 1, single buffered']
    #allocation6 [shape = 's32[1]{0}', space=sflag, size = 0x4, scoped, tag = 'scoped memory for tpu_custom_call.1']
    #allocation7 [shape = 'u8[4096]{0}', space=vmem, size = 0x1000, scoped, tag = 'input window, operand 2, single buffered']
    #allocation8 [shape = 'u8[65536]{0}', space=vmem, size = 0x10000, scoped, tag = 'output window, operand 0, single buffered']
    %8 = vsyncpa [#allocation3], 0
    %9 = vsyncpa [#allocation6], 0
    %10 = vsyncpa [#allocation4], 0
    // Predicated region
    $region2: #{tpu_custom_call.1} parent=1 // pred_check
      _
    $region3: #{tpu_custom_call.1} parent=1 // pred_check_branch
      %12 = sbr.rel (0) target = $region5
    $region4: #{tpu_custom_call.1} parent=1 // pred_region
      %s14 = ssub.s32 256, 256
      %15 = vsyncadd [#allocation3], %s14
      %s16 = sshll.u32 [#allocation2], 4
      %s17 = int_to_ptr.vmem [resolvable:$true] %s16
      %22 = dma.hbm_to_vmem [thread:$0]  %s0, 256, %s17, [#allocation3], 128, 128, 8
    $region5: #{tpu_custom_call.1} parent=1 // pred_fallthru
      _
    // Predicated region
    $region6: #{tpu_custom_call.1} parent=1 // pred_check
      _
    $region7: #{tpu_custom_call.1} parent=1 // pred_check_branch
      %24 = sbr.rel (0) target = $region9
    $region8: #{tpu_custom_call.1} parent=1 // pred_region
      %s26 = ssub.s32 8192, 8192
      %27 = vsyncadd [#allocation6], %s26
      %s28 = sshll.u32 [#allocation5], 4
      %s29 = int_to_ptr.vmem [resolvable:$true] %s28
      %34 = dma.hbm_to_vmem [thread:$0]  %s1, 8192, %s29, [#allocation6], 512, 512, 32
    $region9: #{tpu_custom_call.1} parent=1 // pred_fallthru
      _
    // Predicated region
    $region10: #{tpu_custom_call.1} parent=1 // pred_check
      _
    $region11: #{tpu_custom_call.1} parent=1 // pred_check_branch
      %36 = sbr.rel (0) target = $region13
    $region12: #{tpu_custom_call.1} parent=1 // pred_region
      %s38 = ssub.s32 128, 128
      %39 = vsyncadd [#allocation6], %s38
      %s41 = sshll.u32 [#allocation7], 4
      %s42 = int_to_ptr.vmem [resolvable:$true] %s41
      %44 = dma.hbm_to_vmem [thread:$0]  %s2, 128, %s42, [#allocation6]
    $region13: #{tpu_custom_call.1} parent=1 // pred_fallthru
      _
    // Predicated region
    $region14: #{tpu_custom_call.1} parent=1 // pred_check
      _
    $region15: #{tpu_custom_call.1} parent=1 // pred_check_branch
      %46 = sbr.rel (0) target = $region17
    $region16: #{tpu_custom_call.1} parent=1 // pred_region
      %47 = dma.done [#allocation3], 256
    $region17: #{tpu_custom_call.1} parent=1 // pred_fallthru
      _
    // Predicated region
    $region18: #{tpu_custom_call.1} parent=1 // pred_check
      _
    $region19: #{tpu_custom_call.1} parent=1 // pred_check_branch
      %49 = sbr.rel (0) target = $region21
    $region20: #{tpu_custom_call.1} parent=1 // pred_region
      %50 = dma.done [#allocation6], 8192
    $region21: #{tpu_custom_call.1} parent=1 // pred_fallthru
      _
    // Predicated region
    $region22: #{tpu_custom_call.1} parent=1 // pred_check
      _
    $region23: #{tpu_custom_call.1} parent=1 // pred_check_branch
      %52 = sbr.rel (0) target = $region25
    $region24: #{tpu_custom_call.1} parent=1 // pred_region
      %53 = dma.done [#allocation6], 128
    $region25: #{tpu_custom_call.1} parent=1 // pred_fallthru
      _
    %v55 = vld [vmem:[#allocation2] sm:$0xff]
    %v56 = vld [vmem:[#allocation2 + $0x8] sm:$0xff]
    %v57 = vmul.f32 %v55, 1.75
    %v58 = vmul.f32 %v56, 1.75
    %v59 = vld [vmem:[#allocation5] sm:$0xff]
    %v60 = vld [vmem:[#allocation5 + $0x8] sm:$0xff]
    %v61 = vld [vmem:[#allocation5 + $0x10] sm:$0xff]
    %v62 = vld [vmem:[#allocation5 + $0x18] sm:$0xff]
    %v63 = vld [vmem:[#allocation5 + $0x20] sm:$0xff]
    %v64 = vld [vmem:[#allocation5 + $0x28] sm:$0xff]
    %v65 = vld [vmem:[#allocation5 + $0x30] sm:$0xff]
    %v66 = vld [vmem:[#allocation5 + $0x38] sm:$0xff]
    %v67 = vld [vmem:[#allocation5 + $0x40] sm:$0xff]
    %v68 = vld [vmem:[#allocation5 + $0x48] sm:$0xff]
    %v69 = vld [vmem:[#allocation5 + $0x50] sm:$0xff]
    %v70 = vld [vmem:[#allocation5 + $0x58] sm:$0xff]
    %v71 = vld [vmem:[#allocation5 + $0x60] sm:$0xff]
    %v72 = vld [vmem:[#allocation5 + $0x68] sm:$0xff]
    %v73 = vld [vmem:[#allocation5 + $0x70] sm:$0xff]
    %v74 = vld [vmem:[#allocation5 + $0x78] sm:$0xff]
    %v75 = vld [vmem:[#allocation5 + $0x80] sm:$0xff]
    %v76 = vld [vmem:[#allocation5 + $0x88] sm:$0xff]
    %v77 = vld [vmem:[#allocation5 + $0x90] sm:$0xff]
    %v78 = vld [vmem:[#allocation5 + $0x98] sm:$0xff]
    %v79 = vld [vmem:[#allocation5 + $0xa0] sm:$0xff]
    %v80 = vld [vmem:[#allocation5 + $0xa8] sm:$0xff]
    %v81 = vld [vmem:[#allocation5 + $0xb0] sm:$0xff]
    %v82 = vld [vmem:[#allocation5 + $0xb8] sm:$0xff]
    %v83 = vld [vmem:[#allocation5 + $0xc0] sm:$0xff]
    %v84 = vld [vmem:[#allocation5 + $0xc8] sm:$0xff]
    %v85 = vld [vmem:[#allocation5 + $0xd0] sm:$0xff]
    %v86 = vld [vmem:[#allocation5 + $0xd8] sm:$0xff]
    %v87 = vld [vmem:[#allocation5 + $0xe0] sm:$0xff]
    %v88 = vld [vmem:[#allocation5 + $0xe8] sm:$0xff]
    %v89 = vld [vmem:[#allocation5 + $0xf0] sm:$0xff]
    %v90 = vld [vmem:[#allocation5 + $0xf8] sm:$0xff]
    %v91 = vld [vmem:[#allocation5 + $0x100] sm:$0xff]
    %v92 = vld [vmem:[#allocation5 + $0x108] sm:$0xff]
    %v93 = vld [vmem:[#allocation5 + $0x110] sm:$0xff]
    %v94 = vld [vmem:[#allocation5 + $0x118] sm:$0xff]
    %v95 = vld [vmem:[#allocation5 + $0x120] sm:$0xff]
    %v96 = vld [vmem:[#allocation5 + $0x128] sm:$0xff]
    %v97 = vld [vmem:[#allocation5 + $0x130] sm:$0xff]
    %v98 = vld [vmem:[#allocation5 + $0x138] sm:$0xff]
    %v99 = vld [vmem:[#allocation5 + $0x140] sm:$0xff]
    %v100 = vld [vmem:[#allocation5 + $0x148] sm:$0xff]
    %v101 = vld [vmem:[#allocation5 + $0x150] sm:$0xff]
    %v102 = vld [vmem:[#allocation5 + $0x158] sm:$0xff]
    %v103 = vld [vmem:[#allocation5 + $0x160] sm:$0xff]
    %v104 = vld [vmem:[#allocation5 + $0x168] sm:$0xff]
    %v105 = vld [vmem:[#allocation5 + $0x170] sm:$0xff]
    %v106 = vld [vmem:[#allocation5 + $0x178] sm:$0xff]
    %v107 = vld [vmem:[#allocation5 + $0x180] sm:$0xff]
    %v108 = vld [vmem:[#allocation5 + $0x188] sm:$0xff]
    %v109 = vld [vmem:[#allocation5 + $0x190] sm:$0xff]
    %v110 = vld [vmem:[#allocation5 + $0x198] sm:$0xff]
    %v111 = vld [vmem:[#allocation5 + $0x1a0] sm:$0xff]
    %v112 = vld [vmem:[#allocation5 + $0x1a8] sm:$0xff]
    %v113 = vld [vmem:[#allocation5 + $0x1b0] sm:$0xff]
    %v114 = vld [vmem:[#allocation5 + $0x1b8] sm:$0xff]
    %v115 = vld [vmem:[#allocation5 + $0x1c0] sm:$0xff]
    %v116 = vld [vmem:[#allocation5 + $0x1c8] sm:$0xff]
    %v117 = vld [vmem:[#allocation5 + $0x1d0] sm:$0xff]
    %v118 = vld [vmem:[#allocation5 + $0x1d8] sm:$0xff]
    %v119 = vld [vmem:[#allocation5 + $0x1e0] sm:$0xff]
    %v120 = vld [vmem:[#allocation5 + $0x1e8] sm:$0xff]
    %v121 = vld [vmem:[#allocation5 + $0x1f0] sm:$0xff]
    %v122 = vld [vmem:[#allocation5 + $0x1f8] sm:$0xff]
    %v123 = vpack.c.bf16 %v58, %v57
    %v124 = vunpack.c.l.bf16 %v123
    %v125 = vunpack.c.h.bf16 %v123
    %v126 = vsub.f32 %v57, %v124
    %v127 = vsub.f32 %v58, %v125
    %v128 = vpack.c.bf16 %v127, %v126
    %v129 = vunpack.c.l.bf16 %v128
    %v130 = vunpack.c.h.bf16 %v128
    %v131 = vsub.f32 %v126, %v129
    %v132 = vsub.f32 %v127, %v130
    %v197 = vunpack.c.l.b16 %v59
    %v198 = vunpack.c.h.b16 %v59
    %v199 = vunpack.c.l.b16 %v60
    %v200 = vunpack.c.h.b16 %v60
    %v201 = vunpack.c.l.b16 %v61
    %v202 = vunpack.c.h.b16 %v61
    %v203 = vunpack.c.l.b16 %v62
    %v204 = vunpack.c.h.b16 %v62
    %v205 = vunpack.c.l.b16 %v63
    %v206 = vunpack.c.h.b16 %v63
    %v207 = vunpack.c.l.b16 %v64
    %v208 = vunpack.c.h.b16 %v64
    %v209 = vunpack.c.l.b16 %v65
    %v210 = vunpack.c.h.b16 %v65
    %v211 = vunpack.c.l.b16 %v66
    %v212 = vunpack.c.h.b16 %v66
    %v213 = vunpack.c.l.b16 %v67
    %v214 = vunpack.c.h.b16 %v67
    %v215 = vunpack.c.l.b16 %v68
    %v216 = vunpack.c.h.b16 %v68
    %v217 = vunpack.c.l.b16 %v69
    %v218 = vunpack.c.h.b16 %v69
    %v219 = vunpack.c.l.b16 %v70
    %v220 = vunpack.c.h.b16 %v70
    %v221 = vunpack.c.l.b16 %v71
    %v222 = vunpack.c.h.b16 %v71
    %v223 = vunpack.c.l.b16 %v72
    %v224 = vunpack.c.h.b16 %v72
    %v225 = vunpack.c.l.b16 %v73
    %v226 = vunpack.c.h.b16 %v73
    %v227 = vunpack.c.l.b16 %v74
    %v228 = vunpack.c.h.b16 %v74
    %v229 = vunpack.c.l.b16 %v75
    %v230 = vunpack.c.h.b16 %v75
    %v231 = vunpack.c.l.b16 %v76
    %v232 = vunpack.c.h.b16 %v76
    %v233 = vunpack.c.l.b16 %v77
    %v234 = vunpack.c.h.b16 %v77
    %v235 = vunpack.c.l.b16 %v78
    %v236 = vunpack.c.h.b16 %v78
    %v237 = vunpack.c.l.b16 %v79
    %v238 = vunpack.c.h.b16 %v79
    %v239 = vunpack.c.l.b16 %v80
    %v240 = vunpack.c.h.b16 %v80
    %v241 = vunpack.c.l.b16 %v81
    %v242 = vunpack.c.h.b16 %v81
    %v243 = vunpack.c.l.b16 %v82
    %v244 = vunpack.c.h.b16 %v82
    %v245 = vunpack.c.l.b16 %v83
    %v246 = vunpack.c.h.b16 %v83
    %v247 = vunpack.c.l.b16 %v84
    %v248 = vunpack.c.h.b16 %v84
    %v249 = vunpack.c.l.b16 %v85
    %v250 = vunpack.c.h.b16 %v85
    %v251 = vunpack.c.l.b16 %v86
    %v252 = vunpack.c.h.b16 %v86
    %v253 = vunpack.c.l.b16 %v87
    %v254 = vunpack.c.h.b16 %v87
    %v255 = vunpack.c.l.b16 %v88
    %v256 = vunpack.c.h.b16 %v88
    %v257 = vunpack.c.l.b16 %v89
    %v258 = vunpack.c.h.b16 %v89
    %v259 = vunpack.c.l.b16 %v90
    %v260 = vunpack.c.h.b16 %v90
    %v261 = vunpack.c.l.b16 %v91
    %v262 = vunpack.c.h.b16 %v91
    %v263 = vunpack.c.l.b16 %v92
    %v264 = vunpack.c.h.b16 %v92
    %v265 = vunpack.c.l.b16 %v93
    %v266 = vunpack.c.h.b16 %v93
    %v267 = vunpack.c.l.b16 %v94
    %v268 = vunpack.c.h.b16 %v94
    %v269 = vunpack.c.l.b16 %v95
    %v270 = vunpack.c.h.b16 %v95
    %v271 = vunpack.c.l.b16 %v96
    %v272 = vunpack.c.h.b16 %v96
    %v273 = vunpack.c.l.b16 %v97
    %v274 = vunpack.c.h.b16 %v97
    %v275 = vunpack.c.l.b16 %v98
    %v276 = vunpack.c.h.b16 %v98
    %v277 = vunpack.c.l.b16 %v99
    %v278 = vunpack.c.h.b16 %v99
    %v279 = vunpack.c.l.b16 %v100
    %v280 = vunpack.c.h.b16 %v100
    %v281 = vunpack.c.l.b16 %v101
    %v282 = vunpack.c.h.b16 %v101
    %v283 = vunpack.c.l.b16 %v102
    %v284 = vunpack.c.h.b16 %v102
    %v285 = vunpack.c.l.b16 %v103
    %v286 = vunpack.c.h.b16 %v103
    %v287 = vunpack.c.l.b16 %v104
    %v288 = vunpack.c.h.b16 %v104
    %v289 = vunpack.c.l.b16 %v105
    %v290 = vunpack.c.h.b16 %v105
    %v291 = vunpack.c.l.b16 %v106
    %v292 = vunpack.c.h.b16 %v106
    %v293 = vunpack.c.l.b16 %v107
    %v294 = vunpack.c.h.b16 %v107
    %v295 = vunpack.c.l.b16 %v108
    %v296 = vunpack.c.h.b16 %v108
    %v297 = vunpack.c.l.b16 %v109
    %v298 = vunpack.c.h.b16 %v109
    %v299 = vunpack.c.l.b16 %v110
    %v300 = vunpack.c.h.b16 %v110
    %v301 = vunpack.c.l.b16 %v111
    %v302 = vunpack.c.h.b16 %v111
    %v303 = vunpack.c.l.b16 %v112
    %v304 = vunpack.c.h.b16 %v112
    %v305 = vunpack.c.l.b16 %v113
    %v306 = vunpack.c.h.b16 %v113
    %v307 = vunpack.c.l.b16 %v114
    %v308 = vunpack.c.h.b16 %v114
    %v309 = vunpack.c.l.b16 %v115
    %v310 = vunpack.c.h.b16 %v115
    %v311 = vunpack.c.l.b16 %v116
    %v312 = vunpack.c.h.b16 %v116
    %v313 = vunpack.c.l.b16 %v117
    %v314 = vunpack.c.h.b16 %v117
    %v315 = vunpack.c.l.b16 %v118
    %v316 = vunpack.c.h.b16 %v118
    %v317 = vunpack.c.l.b16 %v119
    %v318 = vunpack.c.h.b16 %v119
    %v319 = vunpack.c.l.b16 %v120
    %v320 = vunpack.c.h.b16 %v120
    %v321 = vunpack.c.l.b16 %v121
    %v322 = vunpack.c.h.b16 %v121
    %v323 = vunpack.c.l.b16 %v122
    %v324 = vunpack.c.h.b16 %v122
    %v325 = vpack.c.b16 %v205, %v197
    %v326 = vpack.c.b16 %v206, %v198
    %v327 = vpack.c.b16 %v207, %v199
    %v328 = vpack.c.b16 %v208, %v200
    %v329 = vpack.c.b16 %v209, %v201
    %v330 = vpack.c.b16 %v210, %v202
    %v331 = vpack.c.b16 %v211, %v203
    %v332 = vpack.c.b16 %v212, %v204
    %v333 = vpack.c.b16 %v221, %v213
    %v334 = vpack.c.b16 %v222, %v214
    %v335 = vpack.c.b16 %v223, %v215
    %v336 = vpack.c.b16 %v224, %v216
    %v337 = vpack.c.b16 %v225, %v217
    %v338 = vpack.c.b16 %v226, %v218
    %v339 = vpack.c.b16 %v227, %v219
    %v340 = vpack.c.b16 %v228, %v220
    %v341 = vpack.c.b16 %v237, %v229
    %v342 = vpack.c.b16 %v238, %v230
    %v343 = vpack.c.b16 %v239, %v231
    %v344 = vpack.c.b16 %v240, %v232
    %v345 = vpack.c.b16 %v241, %v233
    %v346 = vpack.c.b16 %v242, %v234
    %v347 = vpack.c.b16 %v243, %v235
    %v348 = vpack.c.b16 %v244, %v236
    %v349 = vpack.c.b16 %v253, %v245
    %v350 = vpack.c.b16 %v254, %v246
    %v351 = vpack.c.b16 %v255, %v247
    %v352 = vpack.c.b16 %v256, %v248
    %v353 = vpack.c.b16 %v257, %v249
    %v354 = vpack.c.b16 %v258, %v250
    %v355 = vpack.c.b16 %v259, %v251
    %v356 = vpack.c.b16 %v260, %v252
    %v357 = vpack.c.b16 %v269, %v261
    %v358 = vpack.c.b16 %v270, %v262
    %v359 = vpack.c.b16 %v271, %v263
    %v360 = vpack.c.b16 %v272, %v264
    %v361 = vpack.c.b16 %v273, %v265
    %v362 = vpack.c.b16 %v274, %v266
    %v363 = vpack.c.b16 %v275, %v267
    %v364 = vpack.c.b16 %v276, %v268
    %v365 = vpack.c.b16 %v285, %v277
    %v366 = vpack.c.b16 %v286, %v278
    %v367 = vpack.c.b16 %v287, %v279
    %v368 = vpack.c.b16 %v288, %v280
    %v369 = vpack.c.b16 %v289, %v281
    %v370 = vpack.c.b16 %v290, %v282
    %v371 = vpack.c.b16 %v291, %v283
    %v372 = vpack.c.b16 %v292, %v284
    %v373 = vpack.c.b16 %v301, %v293
    %v374 = vpack.c.b16 %v302, %v294
    %v375 = vpack.c.b16 %v303, %v295
    %v376 = vpack.c.b16 %v304, %v296
    %v377 = vpack.c.b16 %v305, %v297
    %v378 = vpack.c.b16 %v306, %v298
    %v379 = vpack.c.b16 %v307, %v299
    %v380 = vpack.c.b16 %v308, %v300
    %v381 = vpack.c.b16 %v317, %v309
    %v382 = vpack.c.b16 %v318, %v310
    %v383 = vpack.c.b16 %v319, %v311
    %v384 = vpack.c.b16 %v320, %v312
    %v385 = vpack.c.b16 %v321, %v313
    %v386 = vpack.c.b16 %v322, %v314
    %v387 = vpack.c.b16 %v323, %v315
    %v388 = vpack.c.b16 %v324, %v316
    %453 = vmatprep.subr.bf16.mxu0 %v326
    %454 = vmatpush1.bf16.msra.mxu0 %v325
    %455 = vmatprep.subr.bf16.mxu0 %v334
    %456 = vmatpush1.bf16.msra.mxu0 %v333
    %457 = vmatprep.subr.bf16.mxu0 %v342
    %458 = vmatpush1.bf16.msra.mxu0 %v341
    %459 = vmatprep.subr.bf16.mxu0 %v350
    %460 = vmatpush1.bf16.msra.mxu0 %v349
    %461 = vmatprep.subr.bf16.mxu0 %v358
    %462 = vmatpush1.bf16.msra.mxu0 %v357
    %463 = vmatprep.subr.bf16.mxu0 %v366
    %464 = vmatpush1.bf16.msra.mxu0 %v365
    %465 = vmatprep.subr.bf16.mxu0 %v374
    %466 = vmatpush1.bf16.msra.mxu0 %v373
    %467 = vmatprep.subr.bf16.mxu0 %v382
    %468 = vmatpush1.bf16.msra.mxu0 %v381
    %469 = vmatprep.subr.bf16.mxu0 0
    %470 = vmatpush1.bf16.msra.mxu0 0
    %471 = vmatprep.subr.bf16.mxu0 0
    %472 = vmatpush1.bf16.msra.mxu0 0
    %473 = vmatprep.subr.bf16.mxu0 0
    %474 = vmatpush1.bf16.msra.mxu0 0
    %475 = vmatprep.subr.bf16.mxu0 0
    %476 = vmatpush1.bf16.msra.mxu0 0
    %477 = vmatprep.subr.bf16.mxu0 0
    %478 = vmatpush1.bf16.msra.mxu0 0
    %479 = vmatprep.subr.bf16.mxu0 0
    %480 = vmatpush1.bf16.msra.mxu0 0
    %481 = vmatprep.subr.bf16.mxu0 0
    %482 = vmatpush1.bf16.msra.mxu0 0
    %483 = vmatprep.subr.bf16.mxu0 0
    %484 = vmatpush1.bf16.msra.mxu0 0
    %485 = vmatprep.mubr.bf16.mxu0 0
    %486 = vmatmul.mubr.bf16.gmra.mrb[0].mxu0 %v128
    %v487 = vpop.f32.mrb[0].mxu0
    %v488 = vadd.f32 0.0, %v487
    %v489 = vpop.f32.mrb[0].mxu0
    %v490 = vadd.f32 0.0, %v489
    %v491 = vpop.f32.mrb[0].mxu0
    %v492 = vadd.f32 0.0, %v491
    %v493 = vpop.f32.mrb[0].mxu0
    %v494 = vadd.f32 0.0, %v493
    %495 = vdwg.mxu0
    %496 = vmatprep.subr.bf16.mxu0 %v328
    %497 = vmatpush1.bf16.msra.mxu0 %v327
    %498 = vmatprep.subr.bf16.mxu0 %v336
    %499 = vmatpush1.bf16.msra.mxu0 %v335
    %500 = vmatprep.subr.bf16.mxu0 %v344
    %501 = vmatpush1.bf16.msra.mxu0 %v343
    %502 = vmatprep.subr.bf16.mxu0 %v352
    %503 = vmatpush1.bf16.msra.mxu0 %v351
    %504 = vmatprep.subr.bf16.mxu0 %v360
    %505 = vmatpush1.bf16.msra.mxu0 %v359
    %506 = vmatprep.subr.bf16.mxu0 %v368
    %507 = vmatpush1.bf16.msra.mxu0 %v367
    %508 = vmatprep.subr.bf16.mxu0 %v376
    %509 = vmatpush1.bf16.msra.mxu0 %v375
    %510 = vmatprep.subr.bf16.mxu0 %v384
    %511 = vmatpush1.bf16.msra.mxu0 %v383
    %512 = vmatprep.subr.bf16.mxu0 0
    %513 = vmatpush1.bf16.msra.mxu0 0
    %514 = vmatprep.subr.bf16.mxu0 0
    %515 = vmatpush1.bf16.msra.mxu0 0
    %516 = vmatprep.subr.bf16.mxu0 0
    %517 = vmatpush1.bf16.msra.mxu0 0
    %518 = vmatprep.subr.bf16.mxu0 0
    %519 = vmatpush1.bf16.msra.mxu0 0
    %520 = vmatprep.subr.bf16.mxu0 0
    %521 = vmatpush1.bf16.msra.mxu0 0
    %522 = vmatprep.subr.bf16.mxu0 0
    %523 = vmatpush1.bf16.msra.mxu0 0
    %524 = vmatprep.subr.bf16.mxu0 0
    %525 = vmatpush1.bf16.msra.mxu0 0
    %526 = vmatprep.subr.bf16.mxu0 0
    %527 = vmatpush1.bf16.msra.mxu0 0
    %528 = vmatprep.mubr.bf16.mxu0 0
    %529 = vmatmul.mubr.bf16.gmra.mrb[0].mxu0 %v128
    %v530 = vpop.f32.mrb[0].mxu0
    %v531 = vadd.f32 0.0, %v530
    %v532 = vpop.f32.mrb[0].mxu0
    %v533 = vadd.f32 0.0, %v532
    %v534 = vpop.f32.mrb[0].mxu0
    %v535 = vadd.f32 0.0, %v534
    %v536 = vpop.f32.mrb[0].mxu0
    %v537 = vadd.f32 0.0, %v536
    %538 = vdwg.mxu0
    %539 = vmatprep.subr.bf16.mxu0 %v330
    %540 = vmatpush1.bf16.msra.mxu0 %v329
    %541 = vmatprep.subr.bf16.mxu0 %v338
    %542 = vmatpush1.bf16.msra.mxu0 %v337
    %543 = vmatprep.subr.bf16.mxu0 %v346
    %544 = vmatpush1.bf16.msra.mxu0 %v345
    %545 = vmatprep.subr.bf16.mxu0 %v354
    %546 = vmatpush1.bf16.msra.mxu0 %v353
    %547 = vmatprep.subr.bf16.mxu0 %v362
    %548 = vmatpush1.bf16.msra.mxu0 %v361
    %549 = vmatprep.subr.bf16.mxu0 %v370
    %550 = vmatpush1.bf16.msra.mxu0 %v369
    %551 = vmatprep.subr.bf16.mxu0 %v378
    %552 = vmatpush1.bf16.msra.mxu0 %v377
    %553 = vmatprep.subr.bf16.mxu0 %v386
    %554 = vmatpush1.bf16.msra.mxu0 %v385
    %555 = vmatprep.subr.bf16.mxu0 0
    %556 = vmatpush1.bf16.msra.mxu0 0
    %557 = vmatprep.subr.bf16.mxu0 0
    %558 = vmatpush1.bf16.msra.mxu0 0
    %559 = vmatprep.subr.bf16.mxu0 0
    %560 = vmatpush1.bf16.msra.mxu0 0
    %561 = vmatprep.subr.bf16.mxu0 0
    %562 = vmatpush1.bf16.msra.mxu0 0
    %563 = vmatprep.subr.bf16.mxu0 0
    %564 = vmatpush1.bf16.msra.mxu0 0
    %565 = vmatprep.subr.bf16.mxu0 0
    %566 = vmatpush1.bf16.msra.mxu0 0
    %567 = vmatprep.subr.bf16.mxu0 0
    %568 = vmatpush1.bf16.msra.mxu0 0
    %569 = vmatprep.subr.bf16.mxu0 0
    %570 = vmatpush1.bf16.msra.mxu0 0
    %571 = vmatprep.mubr.bf16.mxu0 0
    %572 = vmatmul.mubr.bf16.gmra.mrb[0].mxu0 %v128
    %v573 = vpop.f32.mrb[0].mxu0
    %v574 = vadd.f32 0.0, %v573
    %v575 = vpop.f32.mrb[0].mxu0
    %v576 = vadd.f32 0.0, %v575
    %v577 = vpop.f32.mrb[0].mxu0
    %v578 = vadd.f32 0.0, %v577
    %v579 = vpop.f32.mrb[0].mxu0
    %v580 = vadd.f32 0.0, %v579
    %581 = vdwg.mxu0
    %582 = vmatprep.subr.bf16.mxu0 %v332
    %583 = vmatpush1.bf16.msra.mxu0 %v331
    %584 = vmatprep.subr.bf16.mxu0 %v340
    %585 = vmatpush1.bf16.msra.mxu0 %v339
    %586 = vmatprep.subr.bf16.mxu0 %v348
    %587 = vmatpush1.bf16.msra.mxu0 %v347
    %588 = vmatprep.subr.bf16.mxu0 %v356
    %589 = vmatpush1.bf16.msra.mxu0 %v355
    %590 = vmatprep.subr.bf16.mxu0 %v364
    %591 = vmatpush1.bf16.msra.mxu0 %v363
    %592 = vmatprep.subr.bf16.mxu0 %v372
    %593 = vmatpush1.bf16.msra.mxu0 %v371
    %594 = vmatprep.subr.bf16.mxu0 %v380
    %595 = vmatpush1.bf16.msra.mxu0 %v379
    %596 = vmatprep.subr.bf16.mxu0 %v388
    %597 = vmatpush1.bf16.msra.mxu0 %v387
    %598 = vmatprep.subr.bf16.mxu0 0
    %599 = vmatpush1.bf16.msra.mxu0 0
    %600 = vmatprep.subr.bf16.mxu0 0
    %601 = vmatpush1.bf16.msra.mxu0 0
    %602 = vmatprep.subr.bf16.mxu0 0
    %603 = vmatpush1.bf16.msra.mxu0 0
    %604 = vmatprep.subr.bf16.mxu0 0
    %605 = vmatpush1.bf16.msra.mxu0 0
    %606 = vmatprep.subr.bf16.mxu0 0
    %607 = vmatpush1.bf16.msra.mxu0 0
    %608 = vmatprep.subr.bf16.mxu0 0
    %609 = vmatpush1.bf16.msra.mxu0 0
    %610 = vmatprep.subr.bf16.mxu0 0
    %611 = vmatpush1.bf16.msra.mxu0 0
    %612 = vmatprep.subr.bf16.mxu0 0
    %613 = vmatpush1.bf16.msra.mxu0 0
    %614 = vmatprep.mubr.bf16.mxu0 0
    %615 = vmatmul.mubr.bf16.gmra.mrb[0].mxu0 %v128
    %v616 = vpop.f32.mrb[0].mxu0
    %v617 = vadd.f32 0.0, %v616
    %v618 = vpop.f32.mrb[0].mxu0
    %v619 = vadd.f32 0.0, %v618
    %v620 = vpop.f32.mrb[0].mxu0
    %v621 = vadd.f32 0.0, %v620
    %v622 = vpop.f32.mrb[0].mxu0
    %v623 = vadd.f32 0.0, %v622
    %624 = vdwg.mxu0
    %625 = vmatprep.subr.bf16.mxu0 %v326
    %626 = vmatpush1.bf16.msra.mxu0 %v325
    %627 = vmatprep.subr.bf16.mxu0 %v334
    %628 = vmatpush1.bf16.msra.mxu0 %v333
    %629 = vmatprep.subr.bf16.mxu0 %v342
    %630 = vmatpush1.bf16.msra.mxu0 %v341
    %631 = vmatprep.subr.bf16.mxu0 %v350
    %632 = vmatpush1.bf16.msra.mxu0 %v349
    %633 = vmatprep.subr.bf16.mxu0 %v358
    %634 = vmatpush1.bf16.msra.mxu0 %v357
    %635 = vmatprep.subr.bf16.mxu0 %v366
    %636 = vmatpush1.bf16.msra.mxu0 %v365
    %637 = vmatprep.subr.bf16.mxu0 %v374
    %638 = vmatpush1.bf16.msra.mxu0 %v373
    %639 = vmatprep.subr.bf16.mxu0 %v382
    %640 = vmatpush1.bf16.msra.mxu0 %v381
    %641 = vmatprep.subr.bf16.mxu0 0
    %642 = vmatpush1.bf16.msra.mxu0 0
    %643 = vmatprep.subr.bf16.mxu0 0
    %644 = vmatpush1.bf16.msra.mxu0 0
    %645 = vmatprep.subr.bf16.mxu0 0
    %646 = vmatpush1.bf16.msra.mxu0 0
    %647 = vmatprep.subr.bf16.mxu0 0
    %648 = vmatpush1.bf16.msra.mxu0 0
    %649 = vmatprep.subr.bf16.mxu0 0
    %650 = vmatpush1.bf16.msra.mxu0 0
    %651 = vmatprep.subr.bf16.mxu0 0
    %652 = vmatpush1.bf16.msra.mxu0 0
    %653 = vmatprep.subr.bf16.mxu0 0
    %654 = vmatpush1.bf16.msra.mxu0 0
    %655 = vmatprep.subr.bf16.mxu0 0
    %656 = vmatpush1.bf16.msra.mxu0 0
    %657 = vmatprep.mubr.bf16.mxu0 0
    %658 = vmatmul.mubr.bf16.gmra.mrb[0].mxu0 %v123
    %v659 = vpop.f32.mrb[0].mxu0
    %v660 = vadd.f32 %v488, %v659
    %v661 = vpop.f32.mrb[0].mxu0
    %v662 = vadd.f32 %v490, %v661
    %v663 = vpop.f32.mrb[0].mxu0
    %v664 = vadd.f32 %v492, %v663
    %v665 = vpop.f32.mrb[0].mxu0
    %v666 = vadd.f32 %v494, %v665
    %667 = vdwg.mxu0
    %668 = vmatprep.subr.bf16.mxu0 %v328
    %669 = vmatpush1.bf16.msra.mxu0 %v327
    %670 = vmatprep.subr.bf16.mxu0 %v336
    %671 = vmatpush1.bf16.msra.mxu0 %v335
    %672 = vmatprep.subr.bf16.mxu0 %v344
    %673 = vmatpush1.bf16.msra.mxu0 %v343
    %674 = vmatprep.subr.bf16.mxu0 %v352
    %675 = vmatpush1.bf16.msra.mxu0 %v351
    %676 = vmatprep.subr.bf16.mxu0 %v360
    %677 = vmatpush1.bf16.msra.mxu0 %v359
    %678 = vmatprep.subr.bf16.mxu0 %v368
    %679 = vmatpush1.bf16.msra.mxu0 %v367
    %680 = vmatprep.subr.bf16.mxu0 %v376
    %681 = vmatpush1.bf16.msra.mxu0 %v375
    %682 = vmatprep.subr.bf16.mxu0 %v384
    %683 = vmatpush1.bf16.msra.mxu0 %v383
    %684 = vmatprep.subr.bf16.mxu0 0
    %685 = vmatpush1.bf16.msra.mxu0 0
    %686 = vmatprep.subr.bf16.mxu0 0
    %687 = vmatpush1.bf16.msra.mxu0 0
    %688 = vmatprep.subr.bf16.mxu0 0
    %689 = vmatpush1.bf16.msra.mxu0 0
    %690 = vmatprep.subr.bf16.mxu0 0
    %691 = vmatpush1.bf16.msra.mxu0 0
    %692 = vmatprep.subr.bf16.mxu0 0
    %693 = vmatpush1.bf16.msra.mxu0 0
    %694 = vmatprep.subr.bf16.mxu0 0
    %695 = vmatpush1.bf16.msra.mxu0 0
    %696 = vmatprep.subr.bf16.mxu0 0
    %697 = vmatpush1.bf16.msra.mxu0 0
    %698 = vmatprep.subr.bf16.mxu0 0
    %699 = vmatpush1.bf16.msra.mxu0 0
    %700 = vmatprep.mubr.bf16.mxu0 0
    %701 = vmatmul.mubr.bf16.gmra.mrb[0].mxu0 %v123
    %v702 = vpop.f32.mrb[0].mxu0
    %v703 = vadd.f32 %v531, %v702
    %v704 = vpop.f32.mrb[0].mxu0
    %v705 = vadd.f32 %v533, %v704
    %v706 = vpop.f32.mrb[0].mxu0
    %v707 = vadd.f32 %v535, %v706
    %v708 = vpop.f32.mrb[0].mxu0
    %v709 = vadd.f32 %v537, %v708
    %710 = vdwg.mxu0
    %711 = vmatprep.subr.bf16.mxu0 %v330
    %712 = vmatpush1.bf16.msra.mxu0 %v329
    %713 = vmatprep.subr.bf16.mxu0 %v338
    %714 = vmatpush1.bf16.msra.mxu0 %v337
    %715 = vmatprep.subr.bf16.mxu0 %v346
    %716 = vmatpush1.bf16.msra.mxu0 %v345
    %717 = vmatprep.subr.bf16.mxu0 %v354
    %718 = vmatpush1.bf16.msra.mxu0 %v353
    %719 = vmatprep.subr.bf16.mxu0 %v362
    %720 = vmatpush1.bf16.msra.mxu0 %v361
    %721 = vmatprep.subr.bf16.mxu0 %v370
    %722 = vmatpush1.bf16.msra.mxu0 %v369
    %723 = vmatprep.subr.bf16.mxu0 %v378
    %724 = vmatpush1.bf16.msra.mxu0 %v377
    %725 = vmatprep.subr.bf16.mxu0 %v386
    %726 = vmatpush1.bf16.msra.mxu0 %v385
    %727 = vmatprep.subr.bf16.mxu0 0
    %728 = vmatpush1.bf16.msra.mxu0 0
    %729 = vmatprep.subr.bf16.mxu0 0
    %730 = vmatpush1.bf16.msra.mxu0 0
    %731 = vmatprep.subr.bf16.mxu0 0
    %732 = vmatpush1.bf16.msra.mxu0 0
    %733 = vmatprep.subr.bf16.mxu0 0
    %734 = vmatpush1.bf16.msra.mxu0 0
    %735 = vmatprep.subr.bf16.mxu0 0
    %736 = vmatpush1.bf16.msra.mxu0 0
    %737 = vmatprep.subr.bf16.mxu0 0
    %738 = vmatpush1.bf16.msra.mxu0 0
    %739 = vmatprep.subr.bf16.mxu0 0
    %740 = vmatpush1.bf16.msra.mxu0 0
    %741 = vmatprep.subr.bf16.mxu0 0
    %742 = vmatpush1.bf16.msra.mxu0 0
    %743 = vmatprep.mubr.bf16.mxu0 0
    %744 = vmatmul.mubr.bf16.gmra.mrb[0].mxu0 %v123
    %v745 = vpop.f32.mrb[0].mxu0
    %v746 = vadd.f32 %v574, %v745
    %v747 = vpop.f32.mrb[0].mxu0
    %v748 = vadd.f32 %v576, %v747
    %v749 = vpop.f32.mrb[0].mxu0
    %v750 = vadd.f32 %v578, %v749
    %v751 = vpop.f32.mrb[0].mxu0
    %v752 = vadd.f32 %v580, %v751
    %753 = vdwg.mxu0
    %754 = vmatprep.subr.bf16.mxu0 %v332
    %755 = vmatpush1.bf16.msra.mxu0 %v331
    %756 = vmatprep.subr.bf16.mxu0 %v340
    %757 = vmatpush1.bf16.msra.mxu0 %v339
    %758 = vmatprep.subr.bf16.mxu0 %v348
    %759 = vmatpush1.bf16.msra.mxu0 %v347
    %760 = vmatprep.subr.bf16.mxu0 %v356
    %761 = vmatpush1.bf16.msra.mxu0 %v355
    %762 = vmatprep.subr.bf16.mxu0 %v364
    %763 = vmatpush1.bf16.msra.mxu0 %v363
    %764 = vmatprep.subr.bf16.mxu0 %v372
    %765 = vmatpush1.bf16.msra.mxu0 %v371
    %766 = vmatprep.subr.bf16.mxu0 %v380
    %767 = vmatpush1.bf16.msra.mxu0 %v379
    %768 = vmatprep.subr.bf16.mxu0 %v388
    %769 = vmatpush1.bf16.msra.mxu0 %v387
    %770 = vmatprep.subr.bf16.mxu0 0
    %771 = vmatpush1.bf16.msra.mxu0 0
    %772 = vmatprep.subr.bf16.mxu0 0
    %773 = vmatpush1.bf16.msra.mxu0 0
    %774 = vmatprep.subr.bf16.mxu0 0
    %775 = vmatpush1.bf16.msra.mxu0 0
    %776 = vmatprep.subr.bf16.mxu0 0
    %777 = vmatpush1.bf16.msra.mxu0 0
    %778 = vmatprep.subr.bf16.mxu0 0
    %779 = vmatpush1.bf16.msra.mxu0 0
    %780 = vmatprep.subr.bf16.mxu0 0
    %781 = vmatpush1.bf16.msra.mxu0 0
    %782 = vmatprep.subr.bf16.mxu0 0
    %783 = vmatpush1.bf16.msra.mxu0 0
    %784 = vmatprep.subr.bf16.mxu0 0
    %785 = vmatpush1.bf16.msra.mxu0 0
    %786 = vmatprep.mubr.bf16.mxu0 0
    %787 = vmatmul.mubr.bf16.gmra.mrb[0].mxu0 %v123
    %v788 = vpop.f32.mrb[0].mxu0
    %v789 = vadd.f32 %v617, %v788
    %v790 = vpop.f32.mrb[0].mxu0
    %v791 = vadd.f32 %v619, %v790
    %v792 = vpop.f32.mrb[0].mxu0
    %v793 = vadd.f32 %v621, %v792
    %v794 = vpop.f32.mrb[0].mxu0
    %v795 = vadd.f32 %v623, %v794
    %796 = vdwg.mxu0
    %v797 = vpack.c.bf16 %v132, %v131
    %798 = vmatprep.subr.bf16.mxu0 %v326
    %799 = vmatpush1.bf16.msra.mxu0 %v325
    %800 = vmatprep.subr.bf16.mxu0 %v334
    %801 = vmatpush1.bf16.msra.mxu0 %v333
    %802 = vmatprep.subr.bf16.mxu0 %v342
    %803 = vmatpush1.bf16.msra.mxu0 %v341
    %804 = vmatprep.subr.bf16.mxu0 %v350
    %805 = vmatpush1.bf16.msra.mxu0 %v349
    %806 = vmatprep.subr.bf16.mxu0 %v358
    %807 = vmatpush1.bf16.msra.mxu0 %v357
    %808 = vmatprep.subr.bf16.mxu0 %v366
    %809 = vmatpush1.bf16.msra.mxu0 %v365
    %810 = vmatprep.subr.bf16.mxu0 %v374
    %811 = vmatpush1.bf16.msra.mxu0 %v373
    %812 = vmatprep.subr.bf16.mxu0 %v382
    %813 = vmatpush1.bf16.msra.mxu0 %v381
    %814 = vmatprep.subr.bf16.mxu0 0
    %815 = vmatpush1.bf16.msra.mxu0 0
    %816 = vmatprep.subr.bf16.mxu0 0
    %817 = vmatpush1.bf16.msra.mxu0 0
    %818 = vmatprep.subr.bf16.mxu0 0
    %819 = vmatpush1.bf16.msra.mxu0 0
    %820 = vmatprep.subr.bf16.mxu0 0
    %821 = vmatpush1.bf16.msra.mxu0 0
    %822 = vmatprep.subr.bf16.mxu0 0
    %823 = vmatpush1.bf16.msra.mxu0 0
    %824 = vmatprep.subr.bf16.mxu0 0
    %825 = vmatpush1.bf16.msra.mxu0 0
    %826 = vmatprep.subr.bf16.mxu0 0
    %827 = vmatpush1.bf16.msra.mxu0 0
    %828 = vmatprep.subr.bf16.mxu0 0
    %829 = vmatpush1.bf16.msra.mxu0 0
    %830 = vmatprep.mubr.bf16.mxu0 0
    %831 = vmatmul.mubr.bf16.gmra.mrb[0].mxu0 %v797
    %v832 = vpop.f32.mrb[0].mxu0
    %v833 = vadd.f32 0.0, %v832
    %v834 = vpop.f32.mrb[0].mxu0
    %v835 = vadd.f32 0.0, %v834
    %v836 = vpop.f32.mrb[0].mxu0
    %v837 = vadd.f32 0.0, %v836
    %v838 = vpop.f32.mrb[0].mxu0
    %v839 = vadd.f32 0.0, %v838
    %840 = vdwg.mxu0
    %841 = vmatprep.subr.bf16.mxu0 %v328
    %842 = vmatpush1.bf16.msra.mxu0 %v327
    %843 = vmatprep.subr.bf16.mxu0 %v336
    %844 = vmatpush1.bf16.msra.mxu0 %v335
    %845 = vmatprep.subr.bf16.mxu0 %v344
    %846 = vmatpush1.bf16.msra.mxu0 %v343
    %847 = vmatprep.subr.bf16.mxu0 %v352
    %848 = vmatpush1.bf16.msra.mxu0 %v351
    %849 = vmatprep.subr.bf16.mxu0 %v360
    %850 = vmatpush1.bf16.msra.mxu0 %v359
    %851 = vmatprep.subr.bf16.mxu0 %v368
    %852 = vmatpush1.bf16.msra.mxu0 %v367
    %853 = vmatprep.subr.bf16.mxu0 %v376
    %854 = vmatpush1.bf16.msra.mxu0 %v375
    %855 = vmatprep.subr.bf16.mxu0 %v384
    %856 = vmatpush1.bf16.msra.mxu0 %v383
    %857 = vmatprep.subr.bf16.mxu0 0
    %858 = vmatpush1.bf16.msra.mxu0 0
    %859 = vmatprep.subr.bf16.mxu0 0
    %860 = vmatpush1.bf16.msra.mxu0 0
    %861 = vmatprep.subr.bf16.mxu0 0
    %862 = vmatpush1.bf16.msra.mxu0 0
    %863 = vmatprep.subr.bf16.mxu0 0
    %864 = vmatpush1.bf16.msra.mxu0 0
    %865 = vmatprep.subr.bf16.mxu0 0
    %866 = vmatpush1.bf16.msra.mxu0 0
    %867 = vmatprep.subr.bf16.mxu0 0
    %868 = vmatpush1.bf16.msra.mxu0 0
    %869 = vmatprep.subr.bf16.mxu0 0
    %870 = vmatpush1.bf16.msra.mxu0 0
    %871 = vmatprep.subr.bf16.mxu0 0
    %872 = vmatpush1.bf16.msra.mxu0 0
    %873 = vmatprep.mubr.bf16.mxu0 0
    %874 = vmatmul.mubr.bf16.gmra.mrb[0].mxu0 %v797
    %v875 = vpop.f32.mrb[0].mxu0
    %v876 = vadd.f32 0.0, %v875
    %v877 = vpop.f32.mrb[0].mxu0
    %v878 = vadd.f32 0.0, %v877
    %v879 = vpop.f32.mrb[0].mxu0
    %v880 = vadd.f32 0.0, %v879
    %v881 = vpop.f32.mrb[0].mxu0
    %v882 = vadd.f32 0.0, %v881
    %883 = vdwg.mxu0
    %884 = vmatprep.subr.bf16.mxu0 %v330
    %885 = vmatpush1.bf16.msra.mxu0 %v329
    %886 = vmatprep.subr.bf16.mxu0 %v338
    %887 = vmatpush1.bf16.msra.mxu0 %v337
    %888 = vmatprep.subr.bf16.mxu0 %v346
    %889 = vmatpush1.bf16.msra.mxu0 %v345
    %890 = vmatprep.subr.bf16.mxu0 %v354
    %891 = vmatpush1.bf16.msra.mxu0 %v353
    %892 = vmatprep.subr.bf16.mxu0 %v362
    %893 = vmatpush1.bf16.msra.mxu0 %v361
    %894 = vmatprep.subr.bf16.mxu0 %v370
    %895 = vmatpush1.bf16.msra.mxu0 %v369
    %896 = vmatprep.subr.bf16.mxu0 %v378
    %897 = vmatpush1.bf16.msra.mxu0 %v377
    %898 = vmatprep.subr.bf16.mxu0 %v386
    %899 = vmatpush1.bf16.msra.mxu0 %v385
    %900 = vmatprep.subr.bf16.mxu0 0
    %901 = vmatpush1.bf16.msra.mxu0 0
    %902 = vmatprep.subr.bf16.mxu0 0
    %903 = vmatpush1.bf16.msra.mxu0 0
    %904 = vmatprep.subr.bf16.mxu0 0
    %905 = vmatpush1.bf16.msra.mxu0 0
    %906 = vmatprep.subr.bf16.mxu0 0
    %907 = vmatpush1.bf16.msra.mxu0 0
    %908 = vmatprep.subr.bf16.mxu0 0
    %909 = vmatpush1.bf16.msra.mxu0 0
    %910 = vmatprep.subr.bf16.mxu0 0
    %911 = vmatpush1.bf16.msra.mxu0 0
    %912 = vmatprep.subr.bf16.mxu0 0
    %913 = vmatpush1.bf16.msra.mxu0 0
    %914 = vmatprep.subr.bf16.mxu0 0
    %915 = vmatpush1.bf16.msra.mxu0 0
    %916 = vmatprep.mubr.bf16.mxu0 0
    %917 = vmatmul.mubr.bf16.gmra.mrb[0].mxu0 %v797
    %v918 = vpop.f32.mrb[0].mxu0
    %v919 = vadd.f32 0.0, %v918
    %v920 = vpop.f32.mrb[0].mxu0
    %v921 = vadd.f32 0.0, %v920
    %v922 = vpop.f32.mrb[0].mxu0
    %v923 = vadd.f32 0.0, %v922
    %v924 = vpop.f32.mrb[0].mxu0
    %v925 = vadd.f32 0.0, %v924
    %926 = vdwg.mxu0
    %927 = vmatprep.subr.bf16.mxu0 %v332
    %928 = vmatpush1.bf16.msra.mxu0 %v331
    %929 = vmatprep.subr.bf16.mxu0 %v340
    %930 = vmatpush1.bf16.msra.mxu0 %v339
    %931 = vmatprep.subr.bf16.mxu0 %v348
    %932 = vmatpush1.bf16.msra.mxu0 %v347
    %933 = vmatprep.subr.bf16.mxu0 %v356
    %934 = vmatpush1.bf16.msra.mxu0 %v355
    %935 = vmatprep.subr.bf16.mxu0 %v364
    %936 = vmatpush1.bf16.msra.mxu0 %v363
    %937 = vmatprep.subr.bf16.mxu0 %v372
    %938 = vmatpush1.bf16.msra.mxu0 %v371
    %939 = vmatprep.subr.bf16.mxu0 %v380
    %940 = vmatpush1.bf16.msra.mxu0 %v379
    %941 = vmatprep.subr.bf16.mxu0 %v388
    %942 = vmatpush1.bf16.msra.mxu0 %v387
    %943 = vmatprep.subr.bf16.mxu0 0
    %944 = vmatpush1.bf16.msra.mxu0 0
    %945 = vmatprep.subr.bf16.mxu0 0
    %946 = vmatpush1.bf16.msra.mxu0 0
    %947 = vmatprep.subr.bf16.mxu0 0
    %948 = vmatpush1.bf16.msra.mxu0 0
    %949 = vmatprep.subr.bf16.mxu0 0
    %950 = vmatpush1.bf16.msra.mxu0 0
    %951 = vmatprep.subr.bf16.mxu0 0
    %952 = vmatpush1.bf16.msra.mxu0 0
    %953 = vmatprep.subr.bf16.mxu0 0
    %954 = vmatpush1.bf16.msra.mxu0 0
    %955 = vmatprep.subr.bf16.mxu0 0
    %956 = vmatpush1.bf16.msra.mxu0 0
    %957 = vmatprep.subr.bf16.mxu0 0
    %958 = vmatpush1.bf16.msra.mxu0 0
    %959 = vmatprep.mubr.bf16.mxu0 0
    %960 = vmatmul.mubr.bf16.gmra.mrb[0].mxu0 %v797
    %v961 = vpop.f32.mrb[0].mxu0
    %v962 = vadd.f32 0.0, %v961
    %v963 = vpop.f32.mrb[0].mxu0
    %v964 = vadd.f32 0.0, %v963
    %v965 = vpop.f32.mrb[0].mxu0
    %v966 = vadd.f32 0.0, %v965
    %v967 = vpop.f32.mrb[0].mxu0
    %v968 = vadd.f32 0.0, %v967
    %969 = vdwg.mxu0
    %v970 = vadd.f32 %v660, %v833
    %v971 = vadd.f32 %v662, %v835
    %v972 = vadd.f32 %v703, %v876
    %v973 = vadd.f32 %v705, %v878
    %v974 = vadd.f32 %v746, %v919
    %v975 = vadd.f32 %v748, %v921
    %v976 = vadd.f32 %v789, %v962
    %v977 = vadd.f32 %v791, %v964
    %v978 = vadd.f32 %v664, %v837
    %v979 = vadd.f32 %v666, %v839
    %v980 = vadd.f32 %v707, %v880
    %v981 = vadd.f32 %v709, %v882
    %v982 = vadd.f32 %v750, %v923
    %v983 = vadd.f32 %v752, %v925
    %v984 = vadd.f32 %v793, %v966
    %v985 = vadd.f32 %v795, %v968
    %v986 = vld [vmem:[#allocation7] sm:$0xff]
    %v988 = vlaneseq
    %v989 = vshrl.u32 %v988, 7
    %v990 = vsub.s32 0, %v989
    %v991 = vrot.slane %v986, %v990
    %v992 = vlaneseq
    %v993 = vshrl.u32 %v992, 7
    %v994 = vsub.s32 1, %v993
    %v995 = vrot.slane %v986, %v994
    %v996 = vlaneseq
    %v997 = vshrl.u32 %v996, 7
    %v998 = vsub.s32 2, %v997
    %v999 = vrot.slane %v986, %v998
    %v1000 = vlaneseq
    %v1001 = vshrl.u32 %v1000, 7
    %v1002 = vsub.s32 3, %v1001
    %v1003 = vrot.slane %v986, %v1002
    %v1004 = vlaneseq
    %v1005 = vshrl.u32 %v1004, 7
    %v1006 = vsub.s32 4, %v1005
    %v1007 = vrot.slane %v986, %v1006
    %v1008 = vlaneseq
    %v1009 = vshrl.u32 %v1008, 7
    %v1010 = vsub.s32 5, %v1009
    %v1011 = vrot.slane %v986, %v1010
    %v1012 = vlaneseq
    %v1013 = vshrl.u32 %v1012, 7
    %v1014 = vsub.s32 6, %v1013
    %v1015 = vrot.slane %v986, %v1014
    %v1016 = vlaneseq
    %v1017 = vshrl.u32 %v1016, 7
    %v1018 = vsub.s32 7, %v1017
    %v1019 = vrot.slane %v986, %v1018
    %v1028 = vsub.f32 %v970, %v991
    %v1029 = vsub.f32 %v971, %v995
    %v1030 = vsub.f32 %v972, %v999
    %v1031 = vsub.f32 %v973, %v1003
    %v1032 = vsub.f32 %v974, %v1007
    %v1033 = vsub.f32 %v975, %v1011
    %v1034 = vsub.f32 %v976, %v1015
    %v1035 = vsub.f32 %v977, %v1019
    %v1036 = vsub.f32 %v978, %v991
    %v1037 = vsub.f32 %v979, %v995
    %v1038 = vsub.f32 %v980, %v999
    %v1039 = vsub.f32 %v981, %v1003
    %v1040 = vsub.f32 %v982, %v1007
    %v1041 = vsub.f32 %v983, %v1011
    %v1042 = vsub.f32 %v984, %v1015
    %v1043 = vsub.f32 %v985, %v1019
    %v1044 = vmul.f32 %v1028, %v1028
    %v1045 = vmul.f32 %v1029, %v1029
    %v1046 = vmul.f32 %v1030, %v1030
    %v1047 = vmul.f32 %v1031, %v1031
    %v1048 = vmul.f32 %v1032, %v1032
    %v1049 = vmul.f32 %v1033, %v1033
    %v1050 = vmul.f32 %v1034, %v1034
    %v1051 = vmul.f32 %v1035, %v1035
    %v1052 = vmul.f32 %v1036, %v1036
    %v1053 = vmul.f32 %v1037, %v1037
    %v1054 = vmul.f32 %v1038, %v1038
    %v1055 = vmul.f32 %v1039, %v1039
    %v1056 = vmul.f32 %v1040, %v1040
    %v1057 = vmul.f32 %v1041, %v1041
    %v1058 = vmul.f32 %v1042, %v1042
    %v1059 = vmul.f32 %v1043, %v1043
    %v1060 = vsub.f32 0.0, %v1044
    %v1061 = vsub.f32 0.0, %v1045
    %v1062 = vsub.f32 0.0, %v1046
    %v1063 = vsub.f32 0.0, %v1047
    %v1064 = vsub.f32 0.0, %v1048
    %v1065 = vsub.f32 0.0, %v1049
    %v1066 = vsub.f32 0.0, %v1050
    %v1067 = vsub.f32 0.0, %v1051
    %v1068 = vsub.f32 0.0, %v1052
    %v1069 = vsub.f32 0.0, %v1053
    %v1070 = vsub.f32 0.0, %v1054
    %v1071 = vsub.f32 0.0, %v1055
    %v1072 = vsub.f32 0.0, %v1056
    %v1073 = vsub.f32 0.0, %v1057
    %v1074 = vsub.f32 0.0, %v1058
    %v1075 = vsub.f32 0.0, %v1059
    %v1076 = vmul.f32 %v1060, 1.442695
    %v1077 = vpow.pop %v1076
    %v1078 = vmul.f32 %v1061, 1.442695
    %v1079 = vpow.pop %v1078
    %v1080 = vmul.f32 %v1062, 1.442695
    %v1081 = vpow.pop %v1080
    %v1082 = vmul.f32 %v1063, 1.442695
    %v1083 = vpow.pop %v1082
    %v1084 = vmul.f32 %v1064, 1.442695
    %v1085 = vpow.pop %v1084
    %v1086 = vmul.f32 %v1065, 1.442695
    %v1087 = vpow.pop %v1086
    %v1088 = vmul.f32 %v1066, 1.442695
    %v1089 = vpow.pop %v1088
    %v1090 = vmul.f32 %v1067, 1.442695
    %v1091 = vpow.pop %v1090
    %v1092 = vmul.f32 %v1068, 1.442695
    %v1093 = vpow.pop %v1092
    %v1094 = vmul.f32 %v1069, 1.442695
    %v1095 = vpow.pop %v1094
    %v1096 = vmul.f32 %v1070, 1.442695
    %v1097 = vpow.pop %v1096
    %v1098 = vmul.f32 %v1071, 1.442695
    %v1099 = vpow.pop %v1098
    %v1100 = vmul.f32 %v1072, 1.442695
    %v1101 = vpow.pop %v1100
    %v1102 = vmul.f32 %v1073, 1.442695
    %v1103 = vpow.pop %v1102
    %v1104 = vmul.f32 %v1074, 1.442695
    %v1105 = vpow.pop %v1104
    %v1106 = vmul.f32 %v1075, 1.442695
    %v1107 = vpow.pop %v1106
    %1108 = vst [vmem:[#allocation8] sm:$0xff] %v1077
    %1109 = vst [vmem:[#allocation8 + $0x8] sm:$0xff] %v1079
    %1110 = vst [vmem:[#allocation8 + $0x10] sm:$0xff] %v1081
    %1111 = vst [vmem:[#allocation8 + $0x18] sm:$0xff] %v1083
    %1112 = vst [vmem:[#allocation8 + $0x20] sm:$0xff] %v1085
    %1113 = vst [vmem:[#allocation8 + $0x28] sm:$0xff] %v1087
    %1114 = vst [vmem:[#allocation8 + $0x30] sm:$0xff] %v1089
    %1115 = vst [vmem:[#allocation8 + $0x38] sm:$0xff] %v1091
    %1116 = vst [vmem:[#allocation8 + $0x40] sm:$0xff] %v1093
    %1117 = vst [vmem:[#allocation8 + $0x48] sm:$0xff] %v1095
    %1118 = vst [vmem:[#allocation8 + $0x50] sm:$0xff] %v1097
    %1119 = vst [vmem:[#allocation8 + $0x58] sm:$0xff] %v1099
    %1120 = vst [vmem:[#allocation8 + $0x60] sm:$0xff] %v1101
    %1121 = vst [vmem:[#allocation8 + $0x68] sm:$0xff] %v1103
    %1122 = vst [vmem:[#allocation8 + $0x70] sm:$0xff] %v1105
    %1123 = vst [vmem:[#allocation8 + $0x78] sm:$0xff] %v1107
    // Predicated region
    $region26: #{tpu_custom_call.1} parent=1 // pred_check
      _
    $region27: #{tpu_custom_call.1} parent=1 // pred_check_branch
      %1125 = sbr.rel (0) target = $region29
    $region28: #{tpu_custom_call.1} parent=1 // pred_region
      %s1127 = ssub.s32 2048, 2048
      %1128 = vsyncadd [#allocation4], %s1127
      %s1129 = sshll.u32 [#allocation8], 4
      %s1130 = int_to_ptr.vmem [resolvable:$true] %s1129
      %1135 = dma.vmem_to_hbm [thread:$0]  %s1130, 2048, %s3, [#allocation4], 1024, 1024, 64
    $region29: #{tpu_custom_call.1} parent=1 // pred_fallthru
      _
    // Predicated region
    $region30: #{tpu_custom_call.1} parent=1 // pred_check
      _
    $region31: #{tpu_custom_call.1} parent=1 // pred_check_branch
      %1137 = sbr.rel (0) target = $region33
    $region32: #{tpu_custom_call.1} parent=1 // pred_region
      %1138 = dma.done [#allocation4], 2048
    $region33: #{tpu_custom_call.1} parent=1 // pred_fallthru
      _
    %1139 = vsyncpa [#allocation3], 1
    %1140 = vsyncpa [#allocation6], 1
    %1141 = vsyncpa [#allocation4], 1

</llo_original>
